<compile_context>
chip_gen: v6e
topology: v6e:2x2x1
jax: 0.10.0
libtpu: 0.0.40
codegen_flags: <defaults>
</compile_context>

<pallas_src>
import functools

import jax
import jax.numpy as jnp
from jax.experimental import pallas as pl
from jax.experimental.pallas import tpu as pltpu


def _softplus_math(x, shift, beta, threshold):
    """Stable shifted-softplus in f32; returns f32."""
    v = x.astype(jnp.float32) + jnp.float32(shift)
    z = v if beta == 1.0 else jnp.float32(beta) * v
    # max(z,0) + log1p(exp(-|z|)) avoids inf intermediates for large z.
    sp = jnp.maximum(z, 0.0) + jnp.log1p(jnp.exp(-jnp.abs(z)))
    if beta != 1.0:
        sp = sp * jnp.float32(1.0 / beta)
    # PyTorch nn.Softplus: identity (v) where beta*v > threshold.
    return jnp.where(z > jnp.float32(threshold), v, sp)


def _shifted_softplus_kernel(x_ref, o_ref, *, shift, beta, threshold):
    o_ref[...] = _softplus_math(x_ref[...], shift, beta, threshold).astype(o_ref.dtype)


def shifted_softplus(x, shift=-5.0, beta=1.0, threshold=20.0, donate_input=False):
    orig_shape = x.shape
    orig_dtype = x.dtype
    total = x.size
    itemsize = jnp.dtype(orig_dtype).itemsize

    flat = x.reshape(-1)
    rem = total % 128
    aligned = total - rem  # 128-aligned prefix handled by the Pallas kernel

    out_main = None
    if aligned > 0:
        # Widest lane-dense last dim (multiple of 128) dividing the aligned
        # prefix -> unmasked lane-dense loads/stores, no padding.
        lanes = next(c for c in (1024, 512, 256, 128) if aligned % c == 0)
        rows = aligned // lanes
        x2d = (flat if rem == 0 else flat[:aligned]).reshape(rows, lanes)

        # Native sublane packing tile: 8 for f32, 16 for bf16/f16, 32 for int8.
        sub = max(8, 32 // itemsize)

        # ~4 MiB blocks: amortizes the ~0.35 us per-step overhead (>=85-90% of
        # the HBM roofline on every generation).
        target_block_bytes = 4 * 1024 * 1024
        block_rows = max(sub, (target_block_bytes // (lanes * itemsize)) // sub * sub)

        # v7x megacore: arrays > ~1 MiB must span >= 2 grid steps so
        # ("parallel",) can shard across the two TensorCores.
        total_bytes = rows * lanes * itemsize
        if total_bytes > (1 << 20):
            half_rows = pl.cdiv(pl.cdiv(rows, 2), sub) * sub
            block_rows = max(sub, min(block_rows, half_rows))

        if block_rows >= rows:
            block_rows = rows  # single full-extent block (small arrays only)

        grid = (pl.cdiv(rows, block_rows),)  # edge block masked by Pallas

        kernel = functools.partial(
            _shifted_softplus_kernel,
            shift=float(shift), beta=float(beta), threshold=float(threshold))

        cost = pl.CostEstimate(
            flops=7 * aligned,
            transcendentals=2 * aligned,
            bytes_accessed=2 * aligned * itemsize)

        extra = {}
        if donate_input:
            # Caller must donate x; elementwise same-shape/dtype -> safe alias.
            extra["input_output_aliases"] = {0: 0}

        out2d = pl.pallas_call(
            kernel,
            out_shape=jax.ShapeDtypeStruct((rows, lanes), orig_dtype),
            grid=grid,
            in_specs=[pl.BlockSpec((block_rows, lanes), lambda i: (i, 0))],
            out_specs=pl.BlockSpec((block_rows, lanes), lambda i: (i, 0)),
            compiler_params=pltpu.CompilerParams(
                dimension_semantics=("parallel",),
                # 4 blocks x 4 MiB double-buffered = 16 MiB; explicit limit so
                # it compiles on v5e (16 MiB scoped default) and leaves
                # headroom under v7x's 64 MiB physical VMEM.
                vmem_limit_bytes=40 * 1024 * 1024),
            cost_estimate=cost,
            **extra,
        )(x2d)
        out_main = out2d.reshape(-1)

    if rem:
        # <=127-element tail: plain jnp in the wrapper (no padded full copies).
        tail = flat[aligned:]
        tail_out = _softplus_math(tail, float(shift), float(beta),
                                  float(threshold)).astype(orig_dtype)
        out_flat = tail_out if out_main is None else jnp.concatenate(
            [out_main, tail_out])
    else:
        out_flat = out_main

    return out_flat.reshape(orig_shape)


def _reference(x, shift=-5.0, beta=1.0, threshold=20.0):
    v = x.astype(jnp.float32) + shift
    z = beta * v
    sp = jnp.maximum(z, 0.0) + jnp.log1p(jnp.exp(-jnp.abs(z)))
    return jnp.where(z > threshold, v, sp / beta).astype(x.dtype)


if __name__ == "__main__":
    key = jax.random.PRNGKey(0)

    # NCHW input, small shape consistent with the module's elementwise forward.
    x = jax.random.normal(key, (2, 4, 16, 16), dtype=jnp.float32) * 10.0
    out = jax.block_until_ready(shifted_softplus(x))
    ref = _reference(x)
    assert out.shape == x.shape and out.dtype == x.dtype
    assert jnp.allclose(out, ref, atol=1e-5, rtol=1e-5)

    # Non-128-divisible shape: exercises the aligned-prefix + jnp-tail path.
    x2 = jax.random.normal(jax.random.PRNGKey(1), (2, 3, 43), dtype=jnp.float32) * 10.0
    out2 = jax.block_until_ready(shifted_softplus(x2))
    ref2 = _reference(x2)
    assert out2.shape == x2.shape and out2.dtype == x2.dtype
    assert jnp.allclose(out2, ref2, atol=1e-5, rtol=1e-5)

    print("KERNEL_OK")
</pallas_src>

<mosaic_0001>
module attributes {stable_mosaic.version = 11 : i64} {
  func.func @_shifted_softplus_kernel(%arg0: i32, %arg1: memref<2x1024xf32, #tpu.memory_space<vmem>>, %arg2: memref<2x1024xf32, #tpu.memory_space<vmem>>) attributes {dimension_semantics = [#tpu.dimension_semantics<parallel>], iteration_bounds = array<i64: 1>, scalar_prefetch = 0 : i64, scratch_operands = 0 : i64, tpu.core_type = #tpu.core_type<tc>, window_params = [{transform_indices = @transform_0, window_bounds = array<i64: 2, 1024>}, {transform_indices = @transform_1, window_bounds = array<i64: 2, 1024>}]} {
    %c0 = arith.constant 0 : index
    %c0_0 = arith.constant 0 : index
    %0 = vector.load %arg1[%c0, %c0_0] : memref<2x1024xf32, #tpu.memory_space<vmem>>, vector<2x1024xf32>
    %cst = arith.constant -5.000000e+00 : f32
    %1 = vector.broadcast %cst : f32 to vector<2x1024xf32>
    %2 = arith.addf %0, %1 : vector<2x1024xf32>
    %cst_1 = arith.constant 0.000000e+00 : f32
    %3 = vector.broadcast %cst_1 : f32 to vector<2x1024xf32>
    %4 = arith.maximumf %2, %3 : vector<2x1024xf32>
    %5 = math.absf %2 : vector<2x1024xf32>
    %cst_2 = arith.constant 0.000000e+00 : f32
    %6 = vector.broadcast %cst_2 : f32 to vector<2x1024xf32>
    %7 = arith.subf %6, %5 : vector<2x1024xf32>
    %8 = math.exp %7 : vector<2x1024xf32>
    %9 = math.log1p %8 : vector<2x1024xf32>
    %10 = arith.addf %4, %9 : vector<2x1024xf32>
    %cst_3 = arith.constant 2.000000e+01 : f32
    %11 = vector.broadcast %cst_3 : f32 to vector<2x1024xf32>
    %12 = arith.cmpf ogt, %2, %11 : vector<2x1024xf32>
    %13 = arith.select %12, %2, %10 : vector<2x1024xi1>, vector<2x1024xf32>
    %c0_4 = arith.constant 0 : index
    %c0_5 = arith.constant 0 : index
    %14 = vector.load %arg2[%c0_4, %c0_5] : memref<2x1024xf32, #tpu.memory_space<vmem>>, vector<2x1024xf32>
    tpu.vector_store %arg2[%c0_4, %c0_5], %13 {strides = array<i32>} : memref<2x1024xf32, #tpu.memory_space<vmem>>, vector<2x1024xf32>,
    return
  }
  func.func @transform_0(%arg0: i32) -> (i32, i32) {
    %c0_i32 = arith.constant 0 : i32
    %c0_i32_0 = arith.constant 0 : i32
    return %arg0, %c0_i32 : i32, i32
  }
  func.func @transform_1(%arg0: i32) -> (i32, i32) {
    %c0_i32 = arith.constant 0 : i32
    %c0_i32_0 = arith.constant 0 : i32
    return %arg0, %c0_i32 : i32, i32
  }
}

</mosaic_0001>

<llo_original>
// kernel: tpu_custom_call.1
$region0: #{tpu_custom_call.1}
  #allocation0 [shape = 'u32[]', space=smem, size = 0x4, offset = 0x4, fixed_abs, tag = 'smem constant byte address 0x4 - core index']
  #allocation1 [shape = 'u32[144,128]{1,0:T(1,128)}', space=vmem, size = 0x12000, scoped, tag = 'internal scratch']
  %s0 = inlined_call_operand.hbm [shape: f32[2,1024], index: 0, kind: input, shape index: {}]
  %s1 = inlined_call_operand.hbm [shape: f32[2,1024], index: 1, kind: output, shape index: {}]
  %s2 = sld [smem:[#allocation0]]
  $region18: #{tpu_custom_call.1} parent=0
    _
  %s4 = ssub.s32 1, %s2
  %s5 = scalar_select 0, %s4, %s2
  $region1: #{tpu_custom_call.1} parent=0
    #allocation2 [shape = 'u8[8192]{0}', space=vmem, size = 0x2000, scoped, tag = 'input window, operand 0, single buffered']
    #allocation3 [shape = 's32[1]{0}', space=sflag, size = 0x4, scoped, tag = 'scoped memory for tpu_custom_call.1']
    #allocation4 [shape = 's32[1]{0}', space=sflag, size = 0x4, scoped, tag = 'scoped memory for tpu_custom_call.1']
    #allocation5 [shape = 'u8[8192]{0}', space=vmem, size = 0x2000, scoped, tag = 'output window, operand 0, single buffered']
    %6 = vsyncpa [#allocation3], 0
    %7 = vsyncpa [#allocation4], 0
    // Predicated region
    $region2: #{tpu_custom_call.1} parent=1 // pred_check
      _
    $region3: #{tpu_custom_call.1} parent=1 // pred_check_branch
      %9 = sbr.rel (0) target = $region5
    $region4: #{tpu_custom_call.1} parent=1 // pred_region
      %s11 = ssub.s32 256, 256
      %12 = vsyncadd [#allocation3], %s11
      %s14 = sshll.u32 [#allocation2], 4
      %s15 = int_to_ptr.vmem [resolvable:$true] %s14
      %17 = dma.hbm_to_vmem [thread:$0]  %s0, 256, %s15, [#allocation3]
    $region5: #{tpu_custom_call.1} parent=1 // pred_fallthru
      _
    // Predicated region
    $region6: #{tpu_custom_call.1} parent=1 // pred_check
      _
    $region7: #{tpu_custom_call.1} parent=1 // pred_check_branch
      %19 = sbr.rel (0) target = $region9
    $region8: #{tpu_custom_call.1} parent=1 // pred_region
      %20 = dma.done [#allocation3], 256
    $region9: #{tpu_custom_call.1} parent=1 // pred_fallthru
      _
    %v21 = vld [vmem:[#allocation2] sm:$0xff]
    %v22 = vld [vmem:[#allocation2 + $0x8] sm:$0xff]
    %v23 = vadd.f32 %v21, -5.0
    %v24 = vadd.f32 %v22, -5.0
    %v25 = vmax.f32 %v23, 0.0
    %v26 = vmax.f32 %v24, 0.0
    %v27 = vand.u32 2147483647, %v23
    %v28 = vand.u32 2147483647, %v24
    %v29 = vsub.f32 0.0, %v27
    %v30 = vsub.f32 0.0, %v28
    %v31 = vmul.f32 %v29, 1.442695
    %v32 = vpow.pop %v31
    %v33 = vmul.f32 %v30, 1.442695
    %v34 = vpow.pop %v33
    %v35 = vadd.f32 %v32, 1.0
    %v36 = vlog2.pop %v35
    %v37 = vmul.f32 %v36, 0.6931472
    %v38 = vmul.f32 -0.5, %v32
    %v39 = vadd.f32 %v38, 1.0
    %v40 = vmul.f32 %v39, %v32
    %v41 = vand.u32 2147483647, %v32
    %vm42 = vcmp.lt.f32.partialorder %v41, 0.0004427343
    %v43 = vsel %vm42, %v40, %v37
    %v44 = vadd.f32 %v34, 1.0
    %v45 = vlog2.pop %v44
    %v46 = vmul.f32 %v45, 0.6931472
    %v47 = vmul.f32 -0.5, %v34
    %v48 = vadd.f32 %v47, 1.0
    %v49 = vmul.f32 %v48, %v34
    %v50 = vand.u32 2147483647, %v34
    %vm51 = vcmp.lt.f32.partialorder %v50, 0.0004427343
    %v52 = vsel %vm51, %v49, %v46
    %v53 = vadd.f32 %v25, %v43
    %v54 = vadd.f32 %v26, %v52
    %vm55 = vcmp.gt.f32.partialorder %v23, 20.0
    %vm56 = vcmp.gt.f32.partialorder %v24, 20.0
    %v57 = vsel %vm55, %v23, %v53
    %v58 = vsel %vm56, %v24, %v54
    %59 = vst [vmem:[#allocation5] sm:$0xff] %v57
    %60 = vst [vmem:[#allocation5 + $0x8] sm:$0xff] %v58
    // Predicated region
    $region10: #{tpu_custom_call.1} parent=1 // pred_check
      _
    $region11: #{tpu_custom_call.1} parent=1 // pred_check_branch
      %62 = sbr.rel (0) target = $region13
    $region12: #{tpu_custom_call.1} parent=1 // pred_region
      %s64 = ssub.s32 256, 256
      %65 = vsyncadd [#allocation4], %s64
      %s67 = sshll.u32 [#allocation5], 4
      %s68 = int_to_ptr.vmem [resolvable:$true] %s67
      %70 = dma.vmem_to_hbm [thread:$0]  %s68, 256, %s1, [#allocation4]
    $region13: #{tpu_custom_call.1} parent=1 // pred_fallthru
      _
    // Predicated region
    $region14: #{tpu_custom_call.1} parent=1 // pred_check
      _
    $region15: #{tpu_custom_call.1} parent=1 // pred_check_branch
      %72 = sbr.rel (0) target = $region17
    $region16: #{tpu_custom_call.1} parent=1 // pred_region
      %73 = dma.done [#allocation4], 256
    $region17: #{tpu_custom_call.1} parent=1 // pred_fallthru
      _
    %74 = vsyncpa [#allocation3], 1
    %75 = vsyncpa [#allocation4], 1

</llo_original>
